<compile_context>
chip_gen: v7x
topology: tpu7x:2x2x1
jax: 0.10.0
libtpu: 0.0.40
codegen_flags: <defaults>
</compile_context>

<pallas_src>
import jax
import jax.numpy as jnp
from jax.experimental import pallas as pl
from jax.experimental.pallas import tpu as pltpu


def _copy_kernel(x_ref, o_ref):
    # Pure lane-dense tile copy; no in-kernel reshape (that would cross
    # (8,128) tile boundaries and force XLU shuffles / extra VMEM copies).
    o_ref[...] = x_ref[...]


def _choose_lane(total, max_lane):
    """Largest multiple of 128 dividing `total`, preferring >= 8 rows."""
    candidates = [l for l in range(128, max_lane + 1, 128) if total % l == 0]
    if not candidates:
        return None
    tall = [l for l in candidates if total // l >= 8]
    return max(tall) if tall else max(candidates)


def _lane_dense_copy(x2, total, dtype, target_block_bytes, max_lane,
                     vmem_limit_bytes):
    """Tiled lane-dense copy of a contiguous buffer, independent of batch N."""
    itemsize = jnp.dtype(dtype).itemsize
    lane = _choose_lane(total, max_lane)
    if lane is None:
        return None                      # total not a multiple of 128
    rows = total // lane

    # Sublane multiple for packed dtypes: 8 (f32) / 16 (bf16) / 32 (int8).
    sub = max(8, 32 // itemsize)
    desired_rows = max(sub, target_block_bytes // (lane * itemsize))
    tr = min(rows, (desired_rows // sub) * sub)
    if tr < rows:
        assert tr % sub == 0 and tr % 8 == 0
    assert lane % 128 == 0

    slab = jnp.reshape(x2, (rows, lane))  # free, order-preserving
    grid = (pl.cdiv(rows, tr),)

    out = pl.pallas_call(
        _copy_kernel,
        out_shape=jax.ShapeDtypeStruct((rows, lane), dtype),
        grid=grid,
        in_specs=[pl.BlockSpec((tr, lane), lambda i: (i, 0))],
        out_specs=pl.BlockSpec((tr, lane), lambda i: (i, 0)),
        compiler_params=pltpu.CompilerParams(
            dimension_semantics=("parallel",),
            vmem_limit_bytes=vmem_limit_bytes,
        ),
        cost_estimate=pl.CostEstimate(
            flops=0, transcendentals=0,
            bytes_accessed=2 * total * itemsize),
    )(slab)
    return out


def flatten_1d(x, *, copy_through_pallas=False, target_block_bytes=4 << 20,
               max_lane=1024, vmem_limit_bytes=32 << 20):
    """Pallas equivalent of FlattenLayer_1d.forward: (N, ...) -> (N, prod(...)).

    Default path is the metadata-only reshape (the optimal implementation).
    copy_through_pallas=True routes the result through a lane-dense Pallas
    copy kernel (useful only as an explicit fusion anchor / for testing).
    """
    n = x.shape[0]
    flat = 1
    for d in x.shape[1:]:
        flat *= d

    # Free flatten; element order matches torch's .view(N, -1) on contiguous
    # row-major (NCHW) input.
    y = jnp.reshape(x, (n, flat))
    if not copy_through_pallas:
        return y

    total = n * flat
    out = _lane_dense_copy(y, total, x.dtype, target_block_bytes, max_lane,
                           vmem_limit_bytes)
    if out is None:
        # total not 128-divisible: lane-dense re-chunk impossible; the flatten
        # is metadata-only anyway, so just return the reshape.
        return y
    return jnp.reshape(out, (n, flat))


if __name__ == "__main__":
    key = jax.random.PRNGKey(0)
    # Small NCHW input consistent with a conv-net feature map feeding a flatten.
    x = jax.random.normal(key, (2, 4, 16, 16), dtype=jnp.float32)

    # Reference: plain reshape (matches torch .view(N, -1) for contiguous NCHW).
    y_ref = x.reshape(x.shape[0], -1)

    # Fast path (metadata-only reshape, no kernel).
    y_fast = jax.block_until_ready(flatten_1d(x))
    assert y_fast.shape == (2, 4 * 16 * 16) and y_fast.dtype == x.dtype
    assert jnp.array_equal(y_fast, y_ref)

    # Pallas lane-dense copy path (single (8, 256) block for this input).
    y = jax.block_until_ready(flatten_1d(x, copy_through_pallas=True))
    assert y.shape == (2, 4 * 16 * 16) and y.dtype == x.dtype
    assert jnp.array_equal(y, y_ref)

    # Exercise the multi-block tiled path: lane=128, rows=16, tr=8 -> grid=(2,).
    y_tiled = jax.block_until_ready(
        flatten_1d(x, copy_through_pallas=True,
                   target_block_bytes=4096, max_lane=128))
    assert jnp.array_equal(y_tiled, y_ref)

    print("KERNEL_OK")
</pallas_src>

<mosaic_0001>
module attributes {stable_mosaic.version = 11 : i64} {
  func.func @_copy_kernel(%arg0: i32, %arg1: memref<8x256xf32, #tpu.memory_space<vmem>>, %arg2: memref<8x256xf32, #tpu.memory_space<vmem>>) attributes {dimension_semantics = [#tpu.dimension_semantics<parallel>], iteration_bounds = array<i64: 1>, scalar_prefetch = 0 : i64, scratch_operands = 0 : i64, tpu.core_type = #tpu.core_type<tc>, window_params = [{transform_indices = @transform_0, window_bounds = array<i64: 8, 256>}, {transform_indices = @transform_1, window_bounds = array<i64: 8, 256>}]} {
    %c0 = arith.constant 0 : index
    %c0_0 = arith.constant 0 : index
    %0 = vector.load %arg1[%c0, %c0_0] : memref<8x256xf32, #tpu.memory_space<vmem>>, vector<8x256xf32>
    %c0_1 = arith.constant 0 : index
    %c0_2 = arith.constant 0 : index
    %1 = vector.load %arg2[%c0_1, %c0_2] : memref<8x256xf32, #tpu.memory_space<vmem>>, vector<8x256xf32>
    tpu.vector_store %arg2[%c0_1, %c0_2], %0 {strides = array<i32>} : memref<8x256xf32, #tpu.memory_space<vmem>>, vector<8x256xf32>,
    return
  }
  func.func @transform_0(%arg0: i32) -> (i32, i32) {
    %c0_i32 = arith.constant 0 : i32
    %c0_i32_0 = arith.constant 0 : i32
    return %arg0, %c0_i32 : i32, i32
  }
  func.func @transform_1(%arg0: i32) -> (i32, i32) {
    %c0_i32 = arith.constant 0 : i32
    %c0_i32_0 = arith.constant 0 : i32
    return %arg0, %c0_i32 : i32, i32
  }
}

</mosaic_0001>

<llo_original>
// kernel: tpu_custom_call.1
$region0: #{tpu_custom_call.1}
  #allocation0 [shape = 'u32[]', space=smem, size = 0x4, offset = 0x4, fixed_abs, tag = 'smem constant byte address 0x4 - core index']
  #allocation1 [shape = 'u32[144,128]{1,0:T(1,128)}', space=vmem, size = 0x12000, scoped, tag = 'internal scratch']
  %s0 = inlined_call_operand.hbm [shape: f32[8,256], index: 0, kind: input, shape index: {}]
  %s1 = inlined_call_operand.hbm [shape: f32[8,256], index: 1, kind: output, shape index: {}]
  %s2 = sld [smem:[#allocation0]]
  $region18: #{tpu_custom_call.1} parent=0
    _
  %s4 = ssub.s32 1, %s2
  %s5 = scalar_select 0, %s4, %s2
  $region1: #{tpu_custom_call.1} parent=0
    #allocation2 [shape = 'u8[8192]{0}', space=vmem, size = 0x2000, scoped, tag = 'input window, operand 0, single buffered']
    #allocation3 [shape = 's32[1]{0}', space=sflag, size = 0x4, scoped, tag = 'scoped memory for tpu_custom_call.1']
    #allocation4 [shape = 's32[1]{0}', space=sflag, size = 0x4, scoped, tag = 'scoped memory for tpu_custom_call.1']
    #allocation5 [shape = 'u8[8192]{0}', space=vmem, size = 0x2000, scoped, tag = 'output window, operand 0, single buffered']
    %6 = vsyncpa [#allocation3], 0
    %7 = vsyncpa [#allocation4], 0
    // Predicated region
    $region2: #{tpu_custom_call.1} parent=1 // pred_check
      _
    $region3: #{tpu_custom_call.1} parent=1 // pred_check_branch
      %9 = sbr.rel (0) target = $region5
    $region4: #{tpu_custom_call.1} parent=1 // pred_region
      %s11 = ssub.s32 256, 256
      %12 = vsyncadd [#allocation3], %s11
      %s14 = sshll.u32 [#allocation2], 4
      %s15 = int_to_ptr.vmem [resolvable:$true] %s14
      %17 = dma.hbm_to_vmem [thread:$0]  %s0, 256, %s15, [#allocation3]
    $region5: #{tpu_custom_call.1} parent=1 // pred_fallthru
      _
    // Predicated region
    $region6: #{tpu_custom_call.1} parent=1 // pred_check
      _
    $region7: #{tpu_custom_call.1} parent=1 // pred_check_branch
      %19 = sbr.rel (0) target = $region9
    $region8: #{tpu_custom_call.1} parent=1 // pred_region
      %20 = dma.done [#allocation3], 256
    $region9: #{tpu_custom_call.1} parent=1 // pred_fallthru
      _
    %v21 = vld [vmem:[#allocation2] sm:$0xff]
    %v22 = vld [vmem:[#allocation2 + $0x8] sm:$0xff]
    %23 = vst [vmem:[#allocation5] sm:$0xff] %v21
    %24 = vst [vmem:[#allocation5 + $0x8] sm:$0xff] %v22
    // Predicated region
    $region10: #{tpu_custom_call.1} parent=1 // pred_check
      _
    $region11: #{tpu_custom_call.1} parent=1 // pred_check_branch
      %26 = sbr.rel (0) target = $region13
    $region12: #{tpu_custom_call.1} parent=1 // pred_region
      %s28 = ssub.s32 256, 256
      %29 = vsyncadd [#allocation4], %s28
      %s31 = sshll.u32 [#allocation5], 4
      %s32 = int_to_ptr.vmem [resolvable:$true] %s31
      %34 = dma.vmem_to_hbm [thread:$0]  %s32, 256, %s1, [#allocation4]
    $region13: #{tpu_custom_call.1} parent=1 // pred_fallthru
      _
    // Predicated region
    $region14: #{tpu_custom_call.1} parent=1 // pred_check
      _
    $region15: #{tpu_custom_call.1} parent=1 // pred_check_branch
      %36 = sbr.rel (0) target = $region17
    $region16: #{tpu_custom_call.1} parent=1 // pred_region
      %37 = dma.done [#allocation4], 256
    $region17: #{tpu_custom_call.1} parent=1 // pred_fallthru
      _
    %38 = vsyncpa [#allocation3], 1
    %39 = vsyncpa [#allocation4], 1

</llo_original>
